<compile_context>
chip_gen: v6e
topology: v6e:2x2x1
jax: 0.10.0
libtpu: 0.0.40
codegen_flags: <defaults>
</compile_context>

<pallas_src>
import jax
import jax.numpy as jnp
from jax import lax
from jax.experimental import pallas as pl
from jax.experimental.pallas import tpu as pltpu

_LANE = 128
_SUBLANE = 8
_MIN_ALIGN = _SUBLANE * _LANE  # 1024 elements


def _chip_config():
    """Return (num_tensorcores_to_split, vmem_limit_bytes, default_tile_rows).

    Conservative fallbacks if the device kind cannot be determined.
    """
    kind = ""
    try:
        kind = jax.devices()[0].device_kind.lower()
    except Exception:  # pragma: no cover - defensive
        pass
    if "v7" in kind:
        # 2 TensorCores/chip, only 64 MiB VMEM per TC -> leave headroom.
        return 2, 40 * 1024 * 1024, 8192
    if "v4" in kind or "v5p" in kind or "v5 p" in kind:
        # Megacore parts: 2 cores, plenty of VMEM.
        return 2, 48 * 1024 * 1024, 8192
    if "v5e" in kind or "v5 lite" in kind or "v5lite" in kind:
        # Single TC; default scoped VMEM is only 16 MiB -> must raise it.
        return 1, 48 * 1024 * 1024, 8192
    # v6e and unknown: single TC, 128 MiB physical VMEM.
    return 1, 48 * 1024 * 1024, 8192


def _make_kernel(rows, tile_rows, acc_rows, num_steps, ragged):
    """Build the squared-diff partial-sum kernel (constants baked at trace time)."""

    def kernel(yhat_ref, y_ref, out_ref):
        i = pl.program_id(1)

        @pl.when(i == 0)
        def _init():
            out_ref[...] = jnp.zeros_like(out_ref)

        d = yhat_ref[...].astype(jnp.float32) - y_ref[...].astype(jnp.float32)
        sq = d * d

        def fold(v):
            # (tile_rows,128) -> (acc_rows,128) with pure elementwise vreg adds
            # across acc_rows/8 independent accumulator slabs (no cross-lane work).
            return v.reshape(-1, acc_rows, _LANE).sum(axis=0)

        if ragged:
            # Logical (unclamped) position of this block; the input index_map
            # clamps the DMA, so fully-out-of-range blocks re-read the last
            # valid block and are masked to zero here.
            row_start = (pl.program_id(0) * num_steps + i) * tile_rows
            is_edge = row_start + tile_rows > rows

            @pl.when(is_edge)
            def _masked_acc():
                ids = row_start + lax.broadcasted_iota(
                    jnp.int32, (tile_rows, _LANE), 0
                )
                out_ref[...] += fold(jnp.where(ids < rows, sq, 0.0))

            @pl.when(jnp.logical_not(is_edge))
            def _full_acc():
                out_ref[...] += fold(sq)
        else:
            out_ref[...] += fold(sq)

    return kernel


def rmse_loss(yhat: jax.Array, y: jax.Array, *, tile_rows: int | None = None) -> jax.Array:
    assert yhat.shape == y.shape, "yhat and y must have identical shapes"
    n_total = int(yhat.size)
    assert n_total > 0

    num_cores_hw, vmem_limit, default_tile = _chip_config()
    if tile_rows is None:
        tile_rows = default_tile

    # Minimal alignment padding only: round the flat length up to 1024 elements
    # so the lane-dense (rows, 128) view exists and rows is a multiple of 8.
    # (Both inputs are padded with zeros identically -> pad elements add 0.)
    padded_len = -(-n_total // _MIN_ALIGN) * _MIN_ALIGN
    rows = padded_len // _LANE  # multiple of 8

    # Clamp the tile to the problem size; keep it a multiple of 8.
    tile_rows = max(_SUBLANE, min(int(tile_rows), rows))
    tile_rows = (tile_rows // _SUBLANE) * _SUBLANE
    acc_rows = 32 if tile_rows % 32 == 0 else _SUBLANE

    nblocks = -(-rows // tile_rows)
    num_cores = num_cores_hw if nblocks >= 2 else 1
    num_steps = -(-nblocks // num_cores)
    covered_rows = num_cores * num_steps * tile_rows
    ragged = covered_rows != rows  # handled fully in-kernel (masking)

    def _prep(a):
        flat = a.reshape(-1)  # keep input dtype; kernel upcasts to f32
        if padded_len != n_total:
            flat = jnp.pad(flat, (0, padded_len - n_total))
        return flat.reshape(rows, _LANE)

    yhat2 = _prep(yhat)
    y2 = _prep(y)

    def in_map(p, i):
        # Clamp so no block's DMA starts fully past the array; masking in the
        # kernel zeroes any duplicated / out-of-range rows.
        return (jnp.minimum(p * num_steps + i, nblocks - 1), 0)

    partials = pl.pallas_call(
        _make_kernel(rows, tile_rows, acc_rows, num_steps, ragged),
        out_shape=jax.ShapeDtypeStruct((num_cores * acc_rows, _LANE), jnp.float32),
        grid_spec=pltpu.PrefetchScalarGridSpec(
            num_scalar_prefetch=0,
            grid=(num_cores, num_steps),
            in_specs=[
                pl.BlockSpec((tile_rows, _LANE), in_map),
                pl.BlockSpec((tile_rows, _LANE), in_map),
            ],
            out_specs=pl.BlockSpec((acc_rows, _LANE), lambda p, i: (p, 0)),
        ),
        compiler_params=pltpu.CompilerParams(
            dimension_semantics=("parallel", "arbitrary"),
            vmem_limit_bytes=vmem_limit,
        ),
    )(yhat2, y2)

    # Final cross-lane reduce, mean and sqrt in plain JAX (tail-only work).
    out_dtype = jnp.result_type(yhat.dtype, y.dtype)
    total = jnp.sum(partials, dtype=jnp.float32)
    return jnp.sqrt(total / jnp.float32(n_total)).astype(out_dtype)


if __name__ == "__main__":
    key = jax.random.PRNGKey(0)
    k1, k2, k3, k4 = jax.random.split(key, 4)

    # Small shapes consistent with a typical regression output: NCHW (2, 4, 16, 16)
    yhat = jax.random.normal(k1, (2, 4, 16, 16), dtype=jnp.float32)
    y = jax.random.normal(k2, (2, 4, 16, 16), dtype=jnp.float32)

    out = rmse_loss(yhat, y)
    out = jax.block_until_ready(out)

    # Reference check (plain JAX) — mirrors torch.sqrt(nn.MSELoss()(yhat, y)).
    ref = jnp.sqrt(jnp.mean((yhat - y) ** 2))
    assert jnp.allclose(out, ref, rtol=1e-5, atol=1e-6), (out, ref)

    # Second check exercising the ragged-grid / in-kernel masking path
    # (rows = 40 with a 16-row tile -> partial last block, plus a clamped
    #  duplicate block on dual-TensorCore parts).
    a = jax.random.normal(k3, (5, 4, 16, 16), dtype=jnp.float32)
    b = jax.random.normal(k4, (5, 4, 16, 16), dtype=jnp.float32)
    out2 = jax.block_until_ready(rmse_loss(a, b, tile_rows=16))
    ref2 = jnp.sqrt(jnp.mean((a - b) ** 2))
    assert jnp.allclose(out2, ref2, rtol=1e-5, atol=1e-6), (out2, ref2)

    print("KERNEL_OK")
</pallas_src>

<mosaic_0001>
module attributes {stable_mosaic.version = 11 : i64} {
  func.func @kernel(%arg0: i32, %arg1: i32, %arg2: memref<16x128xf32, #tpu.memory_space<vmem>>, %arg3: memref<16x128xf32, #tpu.memory_space<vmem>>, %arg4: memref<8x128xf32, #tpu.memory_space<vmem>>) attributes {dimension_semantics = [#tpu.dimension_semantics<parallel>, #tpu.dimension_semantics<arbitrary>], iteration_bounds = array<i64: 1, 1>, scalar_prefetch = 0 : i64, scratch_operands = 0 : i64, tpu.core_type = #tpu.core_type<tc>, window_params = [{transform_indices = @transform_0, window_bounds = array<i64: 16, 128>}, {transform_indices = @transform_1, window_bounds = array<i64: 16, 128>}, {transform_indices = @transform_2, window_bounds = array<i64: 8, 128>}]} {
    %c0_i32 = arith.constant 0 : i32
    %0 = arith.cmpi eq, %arg1, %c0_i32 : i32
    %1 = arith.extui %0 : i1 to i32
    %c0_i32_0 = arith.constant 0 : i32
    %2 = arith.cmpi ne, %1, %c0_i32_0 : i32
    scf.if %2 {
      %cst_8 = arith.constant 0.000000e+00 : f32
      %12 = vector.broadcast %cst_8 : f32 to vector<8x128xf32>
      %c0_9 = arith.constant 0 : index
      %c0_10 = arith.constant 0 : index
      %13 = vector.load %arg4[%c0_9, %c0_10] : memref<8x128xf32, #tpu.memory_space<vmem>>, vector<8x128xf32>
      tpu.vector_store %arg4[%c0_9, %c0_10], %12 {strides = array<i32>} : memref<8x128xf32, #tpu.memory_space<vmem>>, vector<8x128xf32>,
    } else {
    }
    %c0 = arith.constant 0 : index
    %c0_1 = arith.constant 0 : index
    %3 = vector.load %arg2[%c0, %c0_1] : memref<16x128xf32, #tpu.memory_space<vmem>>, vector<16x128xf32>
    %c0_2 = arith.constant 0 : index
    %c0_3 = arith.constant 0 : index
    %4 = vector.load %arg3[%c0_2, %c0_3] : memref<16x128xf32, #tpu.memory_space<vmem>>, vector<16x128xf32>
    %5 = arith.subf %3, %4 : vector<16x128xf32>
    %6 = arith.mulf %5, %5 : vector<16x128xf32>
    %c0_4 = arith.constant 0 : index
    %c0_5 = arith.constant 0 : index
    %7 = vector.load %arg4[%c0_4, %c0_5] : memref<8x128xf32, #tpu.memory_space<vmem>>, vector<8x128xf32>
    %8 = vector.shape_cast %6 : vector<16x128xf32> to vector<2x8x128xf32>
    %cst = arith.constant dense<0.000000e+00> : vector<8x128xf32>
    %9 = vector.multi_reduction <add>, %8, %cst [0] : vector<2x8x128xf32> to vector<8x128xf32>
    %10 = arith.addf %7, %9 : vector<8x128xf32>
    %c0_6 = arith.constant 0 : index
    %c0_7 = arith.constant 0 : index
    %11 = vector.load %arg4[%c0_6, %c0_7] : memref<8x128xf32, #tpu.memory_space<vmem>>, vector<8x128xf32>
    tpu.vector_store %arg4[%c0_6, %c0_7], %10 {strides = array<i32>} : memref<8x128xf32, #tpu.memory_space<vmem>>, vector<8x128xf32>,
    return
  }
  func.func @transform_0(%arg0: i32, %arg1: i32) -> (i32, i32) {
    %c1_i32 = arith.constant 1 : i32
    %0 = arith.muli %arg0, %c1_i32 : i32
    %1 = arith.addi %0, %arg1 : i32
    %c0_i32 = arith.constant 0 : i32
    %2 = arith.minsi %1, %c0_i32 : i32
    %c0_i32_0 = arith.constant 0 : i32
    %c0_i32_1 = arith.constant 0 : i32
    return %2, %c0_i32_0 : i32, i32
  }
  func.func @transform_1(%arg0: i32, %arg1: i32) -> (i32, i32) {
    %c1_i32 = arith.constant 1 : i32
    %0 = arith.muli %arg0, %c1_i32 : i32
    %1 = arith.addi %0, %arg1 : i32
    %c0_i32 = arith.constant 0 : i32
    %2 = arith.minsi %1, %c0_i32 : i32
    %c0_i32_0 = arith.constant 0 : i32
    %c0_i32_1 = arith.constant 0 : i32
    return %2, %c0_i32_0 : i32, i32
  }
  func.func @transform_2(%arg0: i32, %arg1: i32) -> (i32, i32) {
    %c0_i32 = arith.constant 0 : i32
    %c0_i32_0 = arith.constant 0 : i32
    return %arg0, %c0_i32 : i32, i32
  }
}

</mosaic_0001>

<llo_original>
// kernel: tpu_custom_call.1
$region0: #{tpu_custom_call.1}
  #allocation0 [shape = 'u32[]', space=smem, size = 0x4, offset = 0x4, fixed_abs, tag = 'smem constant byte address 0x4 - core index']
  #allocation1 [shape = 'u32[144,128]{1,0:T(1,128)}', space=vmem, size = 0x12000, scoped, tag = 'internal scratch']
  %s0 = inlined_call_operand.hbm [shape: f32[16,128], index: 0, kind: input, shape index: {}]
  %s1 = inlined_call_operand.hbm [shape: f32[16,128], index: 1, kind: input, shape index: {}]
  %s2 = inlined_call_operand.hbm [shape: f32[8,128], index: 2, kind: output, shape index: {}]
  %s3 = sld [smem:[#allocation0]]
  $region30: #{tpu_custom_call.1} parent=0
    _
  %s5 = ssub.s32 1, %s3
  %s6 = scalar_select 0, %s5, %s3
  $region1: #{tpu_custom_call.1} parent=0
    #allocation2 [shape = 'u8[8192]{0}', space=vmem, size = 0x2000, scoped, tag = 'input window, operand 0, single buffered']
    #allocation3 [shape = 's32[1]{0}', space=sflag, size = 0x4, scoped, tag = 'scoped memory for tpu_custom_call.1']
    #allocation4 [shape = 's32[1]{0}', space=sflag, size = 0x4, scoped, tag = 'scoped memory for tpu_custom_call.1']
    #allocation5 [shape = 'u8[8192]{0}', space=vmem, size = 0x2000, scoped, tag = 'input window, operand 1, single buffered']
    #allocation6 [shape = 's32[1]{0}', space=sflag, size = 0x4, scoped, tag = 'scoped memory for tpu_custom_call.1']
    #allocation7 [shape = 'u8[4096]{0}', space=vmem, size = 0x1000, scoped, tag = 'output window, operand 0, single buffered']
    %7 = vsyncpa [#allocation3], 0
    %8 = vsyncpa [#allocation6], 0
    %9 = vsyncpa [#allocation4], 0
    // Predicated region
    $region2: #{tpu_custom_call.1} parent=1 // pred_check
      _
    $region3: #{tpu_custom_call.1} parent=1 // pred_check_branch
      %11 = sbr.rel (0) target = $region5
    $region4: #{tpu_custom_call.1} parent=1 // pred_region
      %s12 = sadd.s32 0, 0
      %p13 = scmp.lt.s32.totalorder %s12, 0
      %s14 = scalar_select %p13, %s12, 0
      %s15 = smul.u32 2, %s14
      %s17 = ssub.s32 256, 256
      %18 = vsyncadd [#allocation3], %s17
      %s19 = smul.addr %s15, 128
      %s20 = scalar_lea.hbm %s0, %s19
      %s21 = sshll.u32 [#allocation2], 4
      %s22 = int_to_ptr.vmem [resolvable:$true] %s21
      %27 = dma.hbm_to_vmem [thread:$0]  %s20, 256, %s22, [#allocation3], 128, 128, 8
    $region5: #{tpu_custom_call.1} parent=1 // pred_fallthru
      _
    // Predicated region
    $region6: #{tpu_custom_call.1} parent=1 // pred_check
      _
    $region7: #{tpu_custom_call.1} parent=1 // pred_check_branch
      %29 = sbr.rel (0) target = $region9
    $region8: #{tpu_custom_call.1} parent=1 // pred_region
      %s30 = sadd.s32 0, 0
      %p31 = scmp.lt.s32.totalorder %s30, 0
      %s32 = scalar_select %p31, %s30, 0
      %s33 = smul.u32 2, %s32
      %s35 = ssub.s32 256, 256
      %36 = vsyncadd [#allocation6], %s35
      %s37 = smul.addr %s33, 128
      %s38 = scalar_lea.hbm %s1, %s37
      %s39 = sshll.u32 [#allocation5], 4
      %s40 = int_to_ptr.vmem [resolvable:$true] %s39
      %45 = dma.hbm_to_vmem [thread:$0]  %s38, 256, %s40, [#allocation6], 128, 128, 8
    $region9: #{tpu_custom_call.1} parent=1 // pred_fallthru
      _
    // Predicated region
    $region10: #{tpu_custom_call.1} parent=1 // pred_check
      _
    $region11: #{tpu_custom_call.1} parent=1 // pred_check_branch
      %47 = sbr.rel (0) target = $region13
    $region12: #{tpu_custom_call.1} parent=1 // pred_region
      %48 = dma.done [#allocation3], 256
    $region13: #{tpu_custom_call.1} parent=1 // pred_fallthru
      _
    // Predicated region
    $region14: #{tpu_custom_call.1} parent=1 // pred_check
      _
    $region15: #{tpu_custom_call.1} parent=1 // pred_check_branch
      %50 = sbr.rel (0) target = $region17
    $region16: #{tpu_custom_call.1} parent=1 // pred_region
      %51 = dma.done [#allocation6], 256
    $region17: #{tpu_custom_call.1} parent=1 // pred_fallthru
      _
    %s52 = sadd.s32 0, 0
    %p53 = scmp.lt.s32.totalorder %s52, 0
    %s54 = scalar_select %p53, %s52, 0
    %s55 = smul.u32 2, %s54
    %s56 = sadd.s32 0, 0
    %p57 = scmp.lt.s32.totalorder %s56, 0
    %s58 = scalar_select %p57, %s56, 0
    %s59 = smul.u32 2, %s58
    %p60 = scmp.eq.s32.totalorder 0, 0
    // Predicated region
    $region18: #{tpu_custom_call.1} parent=1 // pred_check
      %p61 = pneg %p60
    $region19: #{tpu_custom_call.1} parent=1 // pred_check_branch
      %63 = sbr.rel (%p61) target = $region21
    $region20: #{tpu_custom_call.1} parent=1 // pred_region
      %64 = vst [vmem:[#allocation7] sm:$0xff] 0.0
    $region21: #{tpu_custom_call.1} parent=1 // pred_fallthru
      _
    %v65 = vld [vmem:[#allocation2] sm:$0xff]
    %v66 = vld [vmem:[#allocation2 + $0x8] sm:$0xff]
    %v67 = vld [vmem:[#allocation5] sm:$0xff]
    %v68 = vld [vmem:[#allocation5 + $0x8] sm:$0xff]
    %v69 = vsub.f32 %v65, %v67
    %v70 = vsub.f32 %v66, %v68
    %v71 = vmul.f32 %v69, %v69
    %v72 = vmul.f32 %v70, %v70
    %v73 = vld [vmem:[#allocation7] sm:$0xff]
    %v74 = vadd.f32 %v71, %v72
    %v75 = vadd.f32 %v73, %v74
    %76 = vst [vmem:[#allocation7] sm:$0xff] %v75
    // Predicated region
    $region22: #{tpu_custom_call.1} parent=1 // pred_check
      _
    $region23: #{tpu_custom_call.1} parent=1 // pred_check_branch
      %78 = sbr.rel (0) target = $region25
    $region24: #{tpu_custom_call.1} parent=1 // pred_region
      %s80 = ssub.s32 128, 128
      %81 = vsyncadd [#allocation4], %s80
      %s83 = sshll.u32 [#allocation7], 4
      %s84 = int_to_ptr.vmem [resolvable:$true] %s83
      %86 = dma.vmem_to_hbm [thread:$0]  %s84, 128, %s2, [#allocation4]
    $region25: #{tpu_custom_call.1} parent=1 // pred_fallthru
      _
    // Predicated region
    $region26: #{tpu_custom_call.1} parent=1 // pred_check
      _
    $region27: #{tpu_custom_call.1} parent=1 // pred_check_branch
      %88 = sbr.rel (0) target = $region29
    $region28: #{tpu_custom_call.1} parent=1 // pred_region
      %89 = dma.done [#allocation4], 128
    $region29: #{tpu_custom_call.1} parent=1 // pred_fallthru
      _
    %90 = vsyncpa [#allocation3], 1
    %91 = vsyncpa [#allocation6], 1
    %92 = vsyncpa [#allocation4], 1

</llo_original>
